<compile_context>
chip_gen: v5e
topology: v5e:2x2
jax: 0.10.0
libtpu: 0.0.40
codegen_flags: <defaults>
</compile_context>

<pallas_src>
import functools

import jax
import jax.numpy as jnp
from jax.experimental import pallas as pl
from jax.experimental.pallas import tpu as pltpu

_TARGET_BLOCK_BYTES = 1 << 20  # ~1 MiB of input per grid step


def _round_up(x, m):
    return ((x + m - 1) // m) * m


def _sublane_multiple(itemsize):
    # sublane packing: 8 rows for 4-byte, 16 for 2-byte, 32 for 1-byte dtypes
    return max(8, 32 // int(itemsize))


def _to_rgb_kernel(w_ref, b_ref, x_ref, o_ref):
    """y = W @ x + b for each image in the batch block, one pixel tile per step.

    w_ref: (3, C)      scaled weights in VMEM (x dtype), resident across the grid
    b_ref: (3, 1)      f32 bias in VMEM, resident across the grid
    x_ref: (bn, C, tp) input tile, pixels lane-dense
    o_ref: (bn, 3, tp) output tile, lane-dense stores
    """
    bn = x_ref.shape[0]
    for b in range(bn):  # bn is small & static -> unrolled
        acc = jnp.dot(w_ref[...], x_ref[b], preferred_element_type=jnp.float32)  # (3, tp)
        o_ref[b] = (acc + b_ref[...]).astype(o_ref.dtype)


@functools.partial(jax.jit, static_argnames=("tp_max",))
def to_rgb_forward(x_nchw, weight, bias, *, tp_max=8192):
    """x_nchw: (N, C, H, W); weight: (3, C, 1, 1); bias: (3,) -> (N, 3, H, W)."""
    N, C, H, W = x_nchw.shape
    c_out = weight.shape[0]
    fan_in = C * 1 * 1
    scale = (2.0 / float(fan_in)) ** 0.5  # equalized-LR scale: sqrt(2)/sqrt(fan_in)

    P = H * W
    x_ncp = x_nchw.reshape(N, C, P)  # free, contiguous NCHW-native view

    isz = jnp.dtype(x_nchw.dtype).itemsize
    osz = isz

    # --- pixel tile: multiple of 128, ~1 MiB of input per image slab, capped ---
    tp_max = max(128, (int(tp_max) // 128) * 128)  # guard non-multiple-of-128 tp_max
    tp = _TARGET_BLOCK_BYTES // max(1, C * isz)
    tp = max(128, (tp // 128) * 128)
    tp = min(tp, tp_max, _round_up(P, 128))

    # --- batch block: amortize per-step overhead when per-image tiles are small ---
    per_image_bytes = C * tp * isz
    bn = max(1, min(N, 8, _TARGET_BLOCK_BYTES // max(1, per_image_bytes)))
    while N % bn:  # keep batch blocks exact (no partial batch blocks)
        bn -= 1

    grid = (pl.cdiv(P, tp), N // bn)  # pixel-tile axis first (megacore when N == 1)

    w_mat = (weight.reshape(c_out, C) * scale).astype(x_nchw.dtype)
    b_col = bias.astype(jnp.float32).reshape(c_out, 1)

    x_spec = pl.BlockSpec((bn, C, tp), lambda j, n: (n, 0, j))
    o_spec = pl.BlockSpec((bn, c_out, tp), lambda j, n: (n, 0, j))
    w_spec = pl.BlockSpec((c_out, C), lambda j, n: (0, 0))
    b_spec = pl.BlockSpec((c_out, 1), lambda j, n: (0, 0))

    out_shape = jax.ShapeDtypeStruct((N, c_out, P), x_nchw.dtype)

    # --- VMEM budget (double-buffered blocks) and cost estimate ---
    sub_in = _sublane_multiple(isz)
    sub_out = _sublane_multiple(osz)
    in_block = bn * _round_up(C, sub_in) * tp * isz
    out_block = bn * _round_up(c_out, sub_out) * tp * osz
    w_block = _round_up(c_out, sub_in) * _round_up(C, 128) * isz
    b_block = 8 * 128 * 4
    vmem_est = 2 * (in_block + out_block + w_block + b_block)
    vmem_limit = int(min(max(vmem_est + (4 << 20), 32 << 20), 56 << 20))

    cost = pl.CostEstimate(
        flops=2 * c_out * C * N * P,
        transcendentals=0,
        bytes_accessed=N * C * P * isz + N * c_out * P * osz + c_out * C * isz + c_out * 4,
    )

    y_ncp = pl.pallas_call(
        _to_rgb_kernel,
        out_shape=out_shape,
        grid_spec=pltpu.PrefetchScalarGridSpec(
            num_scalar_prefetch=0,
            grid=grid,
            in_specs=[w_spec, b_spec, x_spec],
            out_specs=o_spec,
        ),
        compiler_params=pltpu.CompilerParams(
            dimension_semantics=("parallel", "parallel"),
            vmem_limit_bytes=vmem_limit,
        ),
        cost_estimate=cost,
    )(w_mat, b_col, x_ncp)

    return y_ncp.reshape(N, c_out, H, W)


def _reference(x, weight, bias):
    N, C, H, W = x.shape
    scale = (2.0 / float(C)) ** 0.5
    w = weight.reshape(3, C).astype(jnp.float32) * scale
    y = jnp.einsum(
        "nchw,oc->nohw", x.astype(jnp.float32), w,
        precision=jax.lax.Precision.HIGHEST,
    ) + bias.astype(jnp.float32).reshape(1, 3, 1, 1)
    return y


if __name__ == "__main__":
    key = jax.random.PRNGKey(0)
    k_x, k_w, k_x2, k_w2, k_x3, k_x4, k_w4 = jax.random.split(key, 7)

    # --- Test 1: small C, f32, NCHW (2, 4, 16, 16); exercises bn=2 batch blocking ---
    N, C, H, W = 2, 4, 16, 16
    x = jax.random.normal(k_x, (N, C, H, W), dtype=jnp.float32)
    weight = jax.random.normal(k_w, (3, C, 1, 1), dtype=jnp.float32)
    bias = jnp.zeros((3,), dtype=jnp.float32)

    y = jax.block_until_ready(to_rgb_forward(x, weight, bias))
    y_ref = _reference(x, weight, bias)
    assert y.shape == (N, 3, H, W)
    assert jnp.allclose(y, y_ref, atol=1e-5, rtol=1e-5)

    # --- Test 2: larger C, f32 ---
    N2, C2, H2, W2 = 1, 64, 16, 16
    x2 = jax.random.normal(k_x2, (N2, C2, H2, W2), dtype=jnp.float32)
    weight2 = jax.random.normal(k_w2, (3, C2, 1, 1), dtype=jnp.float32)
    bias2 = 0.1 * jnp.arange(3, dtype=jnp.float32)
    y2 = jax.block_until_ready(to_rgb_forward(x2, weight2, bias2))
    assert jnp.allclose(y2, _reference(x2, weight2, bias2), atol=1e-4, rtol=1e-4)

    # --- Test 3: awkward spatial size (H*W=100, not a multiple of 128) + bf16, no pad/slice path ---
    N3, C3, H3, W3 = 2, 4, 10, 10
    x3 = jax.random.normal(k_x3, (N3, C3, H3, W3), dtype=jnp.float32).astype(jnp.bfloat16)
    y3 = jax.block_until_ready(to_rgb_forward(x3, weight, bias))
    y3_ref = _reference(x3, weight, bias)
    assert y3.shape == (N3, 3, H3, W3)
    assert jnp.allclose(y3.astype(jnp.float32), y3_ref, atol=5e-2, rtol=5e-2)

    # --- Test 4: bf16 with larger C and H*W=144 (partial pixel tile), loose tolerance ---
    N4, C4, H4, W4 = 1, 64, 12, 12
    x4 = jax.random.normal(k_x4, (N4, C4, H4, W4), dtype=jnp.float32).astype(jnp.bfloat16)
    weight4 = jax.random.normal(k_w4, (3, C4, 1, 1), dtype=jnp.float32)
    bias4 = 0.05 * jnp.arange(3, dtype=jnp.float32)
    y4 = jax.block_until_ready(to_rgb_forward(x4, weight4, bias4))
    y4_ref = _reference(x4, weight4, bias4)
    assert y4.shape == (N4, 3, H4, W4)
    assert jnp.allclose(y4.astype(jnp.float32), y4_ref, atol=1e-1, rtol=1e-1)

    print("KERNEL_OK")
</pallas_src>

<mosaic_0001>
module attributes {stable_mosaic.version = 11 : i64} {
  func.func @_to_rgb_kernel(%arg0: i32, %arg1: i32, %arg2: memref<3x4xf32, #tpu.memory_space<vmem>>, %arg3: memref<3x1xf32, #tpu.memory_space<vmem>>, %arg4: memref<2x4x256xf32, #tpu.memory_space<vmem>>, %arg5: memref<2x3x256xf32, #tpu.memory_space<vmem>>) attributes {dimension_semantics = [#tpu.dimension_semantics<parallel>, #tpu.dimension_semantics<parallel>], iteration_bounds = array<i64: 1, 1>, scalar_prefetch = 0 : i64, scratch_operands = 0 : i64, tpu.core_type = #tpu.core_type<tc>, window_params = [{pipeline_mode = #tpu.pipeline_mode<synchronous>, transform_indices = @transform_0, window_bounds = array<i64: 3, 4>}, {pipeline_mode = #tpu.pipeline_mode<synchronous>, transform_indices = @transform_1, window_bounds = array<i64: 3, 1>}, {transform_indices = @transform_2, window_bounds = array<i64: 2, 4, 256>}, {transform_indices = @transform_3, window_bounds = array<i64: 2, 3, 256>}]} {
    %c0 = arith.constant 0 : index
    %c0_0 = arith.constant 0 : index
    %0 = vector.load %arg2[%c0, %c0_0] : memref<3x4xf32, #tpu.memory_space<vmem>>, vector<3x4xf32>
    %c0_1 = arith.constant 0 : index
    %c0_2 = arith.constant 0 : index
    %c0_3 = arith.constant 0 : index
    %1 = vector.load %arg4[%c0_1, %c0_2, %c0_3] : memref<2x4x256xf32, #tpu.memory_space<vmem>>, vector<1x4x256xf32>
    %2 = vector.shape_cast %1 : vector<1x4x256xf32> to vector<4x256xf32>
    %cst = arith.constant dense<0.000000e+00> : vector<3x256xf32>
    %3 = tpu.matmul %0, %2, %cst {dimension_numbers = #tpu.dot_dimension_numbers<[1], [0], [0], [1], [0, 0, 1, 1], [], []>} : vector<3x4xf32>, vector<4x256xf32>, vector<3x256xf32> -> vector<3x256xf32>
    %c0_4 = arith.constant 0 : index
    %c0_5 = arith.constant 0 : index
    %4 = vector.load %arg3[%c0_4, %c0_5] : memref<3x1xf32, #tpu.memory_space<vmem>>, vector<3x1xf32>
    %5 = vector.broadcast %4 : vector<3x1xf32> to vector<3x256xf32>
    %6 = arith.addf %3, %5 : vector<3x256xf32>
    %c0_6 = arith.constant 0 : index
    %c0_7 = arith.constant 0 : index
    %c0_8 = arith.constant 0 : index
    %7 = vector.load %arg5[%c0_6, %c0_7, %c0_8] : memref<2x3x256xf32, #tpu.memory_space<vmem>>, vector<1x3x256xf32>
    %8 = vector.shape_cast %7 : vector<1x3x256xf32> to vector<3x256xf32>
    %9 = vector.shape_cast %6 : vector<3x256xf32> to vector<1x3x256xf32>
    tpu.vector_store %arg5[%c0_6, %c0_7, %c0_8], %9 {strides = array<i32>} : memref<2x3x256xf32, #tpu.memory_space<vmem>>, vector<1x3x256xf32>,
    %c0_9 = arith.constant 0 : index
    %c0_10 = arith.constant 0 : index
    %10 = vector.load %arg2[%c0_9, %c0_10] : memref<3x4xf32, #tpu.memory_space<vmem>>, vector<3x4xf32>
    %c1 = arith.constant 1 : index
    %c0_11 = arith.constant 0 : index
    %c0_12 = arith.constant 0 : index
    %11 = vector.load %arg4[%c1, %c0_11, %c0_12] : memref<2x4x256xf32, #tpu.memory_space<vmem>>, vector<1x4x256xf32>
    %12 = vector.shape_cast %11 : vector<1x4x256xf32> to vector<4x256xf32>
    %cst_13 = arith.constant dense<0.000000e+00> : vector<3x256xf32>
    %13 = tpu.matmul %10, %12, %cst_13 {dimension_numbers = #tpu.dot_dimension_numbers<[1], [0], [0], [1], [0, 0, 1, 1], [], []>} : vector<3x4xf32>, vector<4x256xf32>, vector<3x256xf32> -> vector<3x256xf32>
    %c0_14 = arith.constant 0 : index
    %c0_15 = arith.constant 0 : index
    %14 = vector.load %arg3[%c0_14, %c0_15] : memref<3x1xf32, #tpu.memory_space<vmem>>, vector<3x1xf32>
    %15 = vector.broadcast %14 : vector<3x1xf32> to vector<3x256xf32>
    %16 = arith.addf %13, %15 : vector<3x256xf32>
    %c1_16 = arith.constant 1 : index
    %c0_17 = arith.constant 0 : index
    %c0_18 = arith.constant 0 : index
    %17 = vector.load %arg5[%c1_16, %c0_17, %c0_18] : memref<2x3x256xf32, #tpu.memory_space<vmem>>, vector<1x3x256xf32>
    %18 = vector.shape_cast %17 : vector<1x3x256xf32> to vector<3x256xf32>
    %19 = vector.shape_cast %16 : vector<3x256xf32> to vector<1x3x256xf32>
    tpu.vector_store %arg5[%c1_16, %c0_17, %c0_18], %19 {strides = array<i32>} : memref<2x3x256xf32, #tpu.memory_space<vmem>>, vector<1x3x256xf32>,
    return
  }
  func.func @transform_0(%arg0: i32, %arg1: i32) -> (i32, i32) {
    %c0_i32 = arith.constant 0 : i32
    %c0_i32_0 = arith.constant 0 : i32
    %c0_i32_1 = arith.constant 0 : i32
    return %c0_i32, %c0_i32_0 : i32, i32
  }
  func.func @transform_1(%arg0: i32, %arg1: i32) -> (i32, i32) {
    %c0_i32 = arith.constant 0 : i32
    %c0_i32_0 = arith.constant 0 : i32
    %c0_i32_1 = arith.constant 0 : i32
    return %c0_i32, %c0_i32_0 : i32, i32
  }
  func.func @transform_2(%arg0: i32, %arg1: i32) -> (i32, i32, i32) {
    %c0_i32 = arith.constant 0 : i32
    %c0_i32_0 = arith.constant 0 : i32
    return %arg1, %c0_i32, %arg0 : i32, i32, i32
  }
  func.func @transform_3(%arg0: i32, %arg1: i32) -> (i32, i32, i32) {
    %c0_i32 = arith.constant 0 : i32
    %c0_i32_0 = arith.constant 0 : i32
    return %arg1, %c0_i32, %arg0 : i32, i32, i32
  }
}

</mosaic_0001>

<llo_original>
// kernel: to_rgb_forward.1
$region0: #{to_rgb_forward.1}
  #allocation0 [shape = 'u32[]', space=smem, size = 0x4, offset = 0x4, fixed_abs, tag = 'smem constant byte address 0x4 - core index']
  #allocation1 [shape = 'u32[72,128]{1,0:T(1,128)}', space=vmem, size = 0x9000, scoped, tag = 'internal scratch']
  %s0 = inlined_call_operand.vmem [shape: f32[3,4], index: 0, kind: input, shape index: {}]
  %s1 = inlined_call_operand.vmem [shape: f32[3,1], index: 1, kind: input, shape index: {}]
  %s2 = inlined_call_operand.vmem [shape: f32[2,4,256], index: 2, kind: input, shape index: {}]
  %s3 = inlined_call_operand.vmem [shape: f32[2,3,256], index: 3, kind: output, shape index: {}]
  %s4 = sld [smem:[#allocation0]]
  $region22: #{to_rgb_forward.1} parent=0
    _
  %s6 = ssub.s32 1, %s4
  %s7 = scalar_select 0, %s6, %s4
  // Predicated region
  $region2: #{to_rgb_forward.1} parent=0 // pred_check
    _
  $region3: #{to_rgb_forward.1} parent=0 // pred_check_branch
    %9 = sbr.rel (0) target = $region5
  $region4: #{to_rgb_forward.1} parent=0 // pred_region
    _
  $region5: #{to_rgb_forward.1} parent=0 // pred_fallthru
    _
  // Predicated region
  $region6: #{to_rgb_forward.1} parent=0 // pred_check
    _
  $region7: #{to_rgb_forward.1} parent=0 // pred_check_branch
    %11 = sbr.rel (0) target = $region9
  $region8: #{to_rgb_forward.1} parent=0 // pred_region
    _
  $region9: #{to_rgb_forward.1} parent=0 // pred_fallthru
    _
  // Predicated region
  $region10: #{to_rgb_forward.1} parent=0 // pred_check
    _
  $region11: #{to_rgb_forward.1} parent=0 // pred_check_branch
    %13 = sbr.rel (0) target = $region13
  $region12: #{to_rgb_forward.1} parent=0 // pred_region
    _
  $region13: #{to_rgb_forward.1} parent=0 // pred_fallthru
    _
  %v14 = vld [vmem:[%s0] sm:$0x7]
  %v15 = vld [vmem:[%s2] sm:$0xff]
  %v16 = vld [vmem:[%s1] sm:$0x7]
  %18 = vset.pattern.permute.xlu0 0
  %19 = vperm.xlu0 %18, %v16
  %v20 = vpop.permute.xlu0 %19
  %23 = vst [vmem:[#allocation1] ss:$2 sm:$0xff] %v15
  %v24 = vld.sshfl [vmem:[#allocation1] sm:$0xff pattern:$0x75316420]
  %v25 = vld.sshfl [vmem:[#allocation1 + $0x8] sm:$0xff pattern:$0x75316420]
  %vm26 = vcmask 31744
  %v28 = vsel %vm26, %v14, 0
  %vm30 = vcmask 1043456
  %v31 = vsel %vm30, %v24, 0
  %v33 = vsel %vm30, %v25, 0
  %35 = vmatpush.msra.mxu0 0.0
  %36 = vmatpush.msra.mxu0 0.0
  %37 = vmatpush.msra.mxu0 0.0
  %38 = vmatpush.msra.mxu0 0.0
  %39 = vmatpush.msra.mxu0 0.0
  %40 = vmatpush.msra.mxu0 0.0
  %41 = vmatpush.msra.mxu0 0.0
  %42 = vmatpush.msra.mxu0 0.0
  %43 = vmatpush.msra.mxu0 0.0
  %44 = vmatpush.msra.mxu0 0.0
  %45 = vmatpush.msra.mxu0 0.0
  %46 = vmatpush.msra.mxu0 0.0
  %47 = vmatpush.msra.mxu0 0.0
  %48 = vmatpush.msra.mxu0 0.0
  %49 = vmatpush.msra.mxu0 0.0
  %50 = vmatpush.msra.mxu0 %v31
  %51 = vmatmul.f32.gmra.mxu0 %v28
  %v52 = vpop.f32.mrf.mxu0
  %v53 = vadd.f32 %v20, %v52
  %54 = vdwg.mxu0
  %55 = vmatpush.msra.mxu0 0.0
  %56 = vmatpush.msra.mxu0 0.0
  %57 = vmatpush.msra.mxu0 0.0
  %58 = vmatpush.msra.mxu0 0.0
  %59 = vmatpush.msra.mxu0 0.0
  %60 = vmatpush.msra.mxu0 0.0
  %61 = vmatpush.msra.mxu0 0.0
  %62 = vmatpush.msra.mxu0 0.0
  %63 = vmatpush.msra.mxu0 0.0
  %64 = vmatpush.msra.mxu0 0.0
  %65 = vmatpush.msra.mxu0 0.0
  %66 = vmatpush.msra.mxu0 0.0
  %67 = vmatpush.msra.mxu0 0.0
  %68 = vmatpush.msra.mxu0 0.0
  %69 = vmatpush.msra.mxu0 0.0
  %70 = vmatpush.msra.mxu0 %v33
  %71 = vmatmul.f32.gmra.mxu0 %v28
  %v72 = vpop.f32.mrf.mxu0
  %v73 = vadd.f32 %v20, %v72
  %74 = vdwg.mxu0
  %v77 = vrot.slane %v73, 4
  %v78 = vsel %vm30, %v53, %v77
  %80 = vst [vmem:[%s3] sm:$0x77] %v78
  %v81 = vld [vmem:[%s0] sm:$0x7]
  %s82 = scalar_lea.vmem %s2, 8
  %v83 = vld [vmem:[%s82] sm:$0xff]
  %v84 = vld [vmem:[%s1] sm:$0x7]
  %86 = vset.pattern.permute.xlu0 0
  %87 = vperm.xlu0 %86, %v84
  %v88 = vpop.permute.xlu0 %87
  %91 = vst [vmem:[#allocation1] ss:$2 sm:$0xff] %v83
  %v92 = vld.sshfl [vmem:[#allocation1] sm:$0xff pattern:$0x75316420]
  %v93 = vld.sshfl [vmem:[#allocation1 + $0x8] sm:$0xff pattern:$0x75316420]
  %v95 = vsel %vm26, %v81, 0
  %v97 = vsel %vm30, %v92, 0
  %v99 = vsel %vm30, %v93, 0
  %101 = vmatpush.msra.mxu0 0.0
  %102 = vmatpush.msra.mxu0 0.0
  %103 = vmatpush.msra.mxu0 0.0
  %104 = vmatpush.msra.mxu0 0.0
  %105 = vmatpush.msra.mxu0 0.0
  %106 = vmatpush.msra.mxu0 0.0
  %107 = vmatpush.msra.mxu0 0.0
  %108 = vmatpush.msra.mxu0 0.0
  %109 = vmatpush.msra.mxu0 0.0
  %110 = vmatpush.msra.mxu0 0.0
  %111 = vmatpush.msra.mxu0 0.0
  %112 = vmatpush.msra.mxu0 0.0
  %113 = vmatpush.msra.mxu0 0.0
  %114 = vmatpush.msra.mxu0 0.0
  %115 = vmatpush.msra.mxu0 0.0
  %116 = vmatpush.msra.mxu0 %v97
  %117 = vmatmul.f32.gmra.mxu0 %v95
  %v118 = vpop.f32.mrf.mxu0
  %v119 = vadd.f32 %v88, %v118
  %120 = vdwg.mxu0
  %121 = vmatpush.msra.mxu0 0.0
  %122 = vmatpush.msra.mxu0 0.0
  %123 = vmatpush.msra.mxu0 0.0
  %124 = vmatpush.msra.mxu0 0.0
  %125 = vmatpush.msra.mxu0 0.0
  %126 = vmatpush.msra.mxu0 0.0
  %127 = vmatpush.msra.mxu0 0.0
  %128 = vmatpush.msra.mxu0 0.0
  %129 = vmatpush.msra.mxu0 0.0
  %130 = vmatpush.msra.mxu0 0.0
  %131 = vmatpush.msra.mxu0 0.0
  %132 = vmatpush.msra.mxu0 0.0
  %133 = vmatpush.msra.mxu0 0.0
  %134 = vmatpush.msra.mxu0 0.0
  %135 = vmatpush.msra.mxu0 0.0
  %136 = vmatpush.msra.mxu0 %v99
  %137 = vmatmul.f32.gmra.mxu0 %v95
  %v138 = vpop.f32.mrf.mxu0
  %v139 = vadd.f32 %v88, %v138
  %140 = vdwg.mxu0
  %v143 = vrot.slane %v139, 4
  %v144 = vsel %vm30, %v119, %v143
  %s146 = scalar_lea.vmem %s3, 8
  %147 = vst [vmem:[%s146] sm:$0x77] %v144
  // Predicated region
  $region14: #{to_rgb_forward.1} parent=0 // pred_check
    _
  $region15: #{to_rgb_forward.1} parent=0 // pred_check_branch
    %149 = sbr.rel (0) target = $region17
  $region16: #{to_rgb_forward.1} parent=0 // pred_region
    _
  $region17: #{to_rgb_forward.1} parent=0 // pred_fallthru
    _
  // Predicated region
  $region18: #{to_rgb_forward.1} parent=0 // pred_check
    _
  $region19: #{to_rgb_forward.1} parent=0 // pred_check_branch
    %151 = sbr.rel (0) target = $region21
  $region20: #{to_rgb_forward.1} parent=0 // pred_region
    _
  $region21: #{to_rgb_forward.1} parent=0 // pred_fallthru
    _

</llo_original>
